<compile_context>
chip_gen: v7x
topology: tpu7x:2x2x1
jax: 0.10.0
libtpu: 0.0.40
codegen_flags: <defaults>
</compile_context>

<pallas_src>
import functools

import jax
import jax.numpy as jnp
from jax.experimental import pallas as pl
from jax.experimental.pallas import tpu as pltpu

_LANE = 128
_NEG_SENTINEL = -1e9  # sigmoid(-1e9) == 0 exactly in f32 -> zero contribution


def _dice_bce_kernel(x_ref, t_ref, out_ref, *, rows, tile_rows,
                     blocks_per_core, need_mask):
    p_id = pl.program_id(0)      # parallel (per-core) axis
    step = pl.program_id(1)      # reduction axis

    @pl.when(step == 0)
    def _init():
        out_ref[...] = jnp.zeros_like(out_ref)

    x = x_ref[...].astype(jnp.float32)   # (tile_rows, 128) logits
    t = t_ref[...].astype(jnp.float32)   # (tile_rows, 128) targets

    if need_mask:
        # Mask rows beyond the real data (partial tail block / duplicated
        # clamped blocks) with sentinel values -> exactly-zero contributions.
        block_start = (p_id * blocks_per_core + step) * tile_rows
        row_ids = jax.lax.broadcasted_iota(jnp.int32, x.shape, 0) + block_start
        valid = row_ids < rows
        x = jnp.where(valid, x, jnp.float32(_NEG_SENTINEL))
        t = jnp.where(valid, t, 0.0)

    # Shared-exp sigmoid / log-sigmoid (softplus identity).
    e = jnp.exp(-jnp.abs(x))                 # EUP, shared
    lse = jnp.log1p(e)                       # softplus(-|x|)
    # torch binary_cross_entropy clamps each log term at -100.
    log_p = jnp.maximum(jnp.minimum(x, 0.0) - lse, -100.0)
    log_1mp = jnp.maximum(-jnp.maximum(x, 0.0) - lse, -100.0)
    p = jnp.where(x >= 0.0, 1.0, e) / (1.0 + e)

    bce = -(t * log_p + (1.0 - t) * log_1mp)

    # Sublane reductions to (1, 128); accumulate into the VMEM-resident
    # output block (written back to HBM only once per core).
    out_ref[0:1, :] += jnp.sum(p * t, axis=0, keepdims=True)   # intersection
    out_ref[1:2, :] += jnp.sum(p, axis=0, keepdims=True)       # sum(sigmoid)
    out_ref[2:3, :] += jnp.sum(t, axis=0, keepdims=True)       # sum(targets)
    out_ref[3:4, :] += jnp.sum(bce, axis=0, keepdims=True)     # BCE sum


@functools.partial(jax.jit,
                   static_argnames=("smooth", "tile_rows", "num_parallel"))
def dice_bce_loss(inputs, targets, smooth=1.0, tile_rows=1024, num_parallel=2):
    """Pallas implementation of DiceBCELoss.forward (returns a scalar f32)."""
    n = inputs.size
    x = inputs.reshape(-1)
    t = targets.reshape(-1)

    # Only the (rare) sub-lane remainder gets padded, with zero-contribution
    # sentinels; the common case streams the original buffers untouched.
    rem = (-n) % _LANE
    if rem:
        x = jnp.pad(x, (0, rem), constant_values=_NEG_SENTINEL)
        t = jnp.pad(t, (0, rem), constant_values=0)
    rows = (n + rem) // _LANE
    x2 = x.reshape(rows, _LANE)
    t2 = t.reshape(rows, _LANE)

    # Tile sizing: multiple of 8 sublanes, capped at the array extent.
    tile_rows = max(8, (int(tile_rows) // 8) * 8)
    tile_rows_eff = min(tile_rows, rows)

    total_blocks = -(-rows // tile_rows_eff)
    num_cores = max(1, min(int(num_parallel), total_blocks))
    blocks_per_core = -(-total_blocks // num_cores)
    need_mask = (total_blocks * tile_rows_eff != rows) or (
        num_cores * blocks_per_core != total_blocks)

    last_blk = total_blocks - 1
    clamp = num_cores * blocks_per_core != total_blocks

    def in_index(p, i):
        blk = p * blocks_per_core + i
        if clamp:
            blk = jnp.minimum(blk, last_blk)
        return (blk, 0)

    tile_spec = pl.BlockSpec((tile_rows_eff, _LANE), in_index)

    kernel = functools.partial(
        _dice_bce_kernel,
        rows=rows,
        tile_rows=tile_rows_eff,
        blocks_per_core=blocks_per_core,
        need_mask=need_mask,
    )

    sums = pl.pallas_call(
        kernel,
        out_shape=jax.ShapeDtypeStruct((num_cores * 8, _LANE), jnp.float32),
        grid_spec=pltpu.PrefetchScalarGridSpec(
            num_scalar_prefetch=0,
            grid=(num_cores, blocks_per_core),
            in_specs=[tile_spec, tile_spec],
            out_specs=pl.BlockSpec((8, _LANE), lambda p, i: (p, 0)),
        ),
        compiler_params=pltpu.CompilerParams(
            dimension_semantics=("parallel", "arbitrary")),
    )(x2, t2)

    # Tiny final reduction + scalar combination (glue, done in JAX).
    per_row = sums.reshape(num_cores, 8, _LANE).sum(axis=(0, 2))  # (8,)
    intersection, p_sum, t_sum, bce_sum = (per_row[0], per_row[1],
                                           per_row[2], per_row[3])

    bce = bce_sum / jnp.float32(n)
    dice_loss = 1.0 - (2.0 * intersection + smooth) / (p_sum + t_sum + smooth)
    return bce + dice_loss


def _reference(inputs, targets, smooth=1.0):
    p = jax.nn.sigmoid(inputs.reshape(-1).astype(jnp.float32))
    t = targets.reshape(-1).astype(jnp.float32)
    inter = jnp.sum(p * t)
    dice = 1.0 - (2.0 * inter + smooth) / (jnp.sum(p) + jnp.sum(t) + smooth)
    bce = jnp.mean(-(t * jnp.maximum(jnp.log(p), -100.0)
                     + (1.0 - t) * jnp.maximum(jnp.log1p(-p), -100.0)))
    return bce + dice


if __name__ == "__main__":
    key = jax.random.PRNGKey(0)
    k1, k2, k3, k4 = jax.random.split(key, 4)

    # Small NCHW-shaped logits and binary targets (segmentation-loss style).
    x = jax.random.normal(k1, (2, 4, 16, 16), dtype=jnp.float32)
    tgt = (jax.random.uniform(k2, (2, 4, 16, 16)) > 0.5).astype(jnp.float32)

    out = dice_bce_loss(x, tgt, smooth=1.0)
    out = jax.block_until_ready(out)
    ref = _reference(x, tgt, smooth=1.0)
    assert jnp.allclose(out, ref, rtol=1e-5, atol=1e-5), (out, ref)

    # Second shape exercises the multi-block / parallel-split / tail-mask path
    # (rows = 1032 > tile_rows = 1024, 2 blocks split across the parallel axis).
    x2 = jax.random.normal(k3, (8, 129, 128), dtype=jnp.float32)
    t2 = (jax.random.uniform(k4, (8, 129, 128)) > 0.5).astype(jnp.float32)
    out2 = jax.block_until_ready(dice_bce_loss(x2, t2, smooth=1.0))
    ref2 = _reference(x2, t2, smooth=1.0)
    assert jnp.allclose(out2, ref2, rtol=1e-5, atol=1e-5), (out2, ref2)

    print("KERNEL_OK")
</pallas_src>

<mosaic_0001>
module attributes {stable_mosaic.version = 11 : i64} {
  func.func @_dice_bce_kernel(%arg0: i32, %arg1: i32, %arg2: memref<16x128xf32, #tpu.memory_space<vmem>>, %arg3: memref<16x128xf32, #tpu.memory_space<vmem>>, %arg4: memref<8x128xf32, #tpu.memory_space<vmem>>) attributes {dimension_semantics = [#tpu.dimension_semantics<parallel>, #tpu.dimension_semantics<arbitrary>], iteration_bounds = array<i64: 1, 1>, scalar_prefetch = 0 : i64, scratch_operands = 0 : i64, tpu.core_type = #tpu.core_type<tc>, window_params = [{transform_indices = @transform_0, window_bounds = array<i64: 16, 128>}, {transform_indices = @transform_1, window_bounds = array<i64: 16, 128>}, {transform_indices = @transform_2, window_bounds = array<i64: 8, 128>}]} {
    %c0_i32 = arith.constant 0 : i32
    %0 = arith.cmpi eq, %arg1, %c0_i32 : i32
    %1 = arith.extui %0 : i1 to i32
    %c0_i32_0 = arith.constant 0 : i32
    %2 = arith.cmpi ne, %1, %c0_i32_0 : i32
    scf.if %2 {
      %cst_31 = arith.constant 0.000000e+00 : f32
      %57 = vector.broadcast %cst_31 : f32 to vector<8x128xf32>
      %c0_32 = arith.constant 0 : index
      %c0_33 = arith.constant 0 : index
      %58 = vector.load %arg4[%c0_32, %c0_33] : memref<8x128xf32, #tpu.memory_space<vmem>>, vector<8x128xf32>
      tpu.vector_store %arg4[%c0_32, %c0_33], %57 {strides = array<i32>} : memref<8x128xf32, #tpu.memory_space<vmem>>, vector<8x128xf32>,
    } else {
    }
    %c0 = arith.constant 0 : index
    %c0_1 = arith.constant 0 : index
    %3 = vector.load %arg2[%c0, %c0_1] : memref<16x128xf32, #tpu.memory_space<vmem>>, vector<16x128xf32>
    %c0_2 = arith.constant 0 : index
    %c0_3 = arith.constant 0 : index
    %4 = vector.load %arg3[%c0_2, %c0_3] : memref<16x128xf32, #tpu.memory_space<vmem>>, vector<16x128xf32>
    %5 = math.absf %3 : vector<16x128xf32>
    %cst = arith.constant 0.000000e+00 : f32
    %6 = vector.broadcast %cst : f32 to vector<16x128xf32>
    %7 = arith.subf %6, %5 : vector<16x128xf32>
    %8 = math.exp %7 : vector<16x128xf32>
    %9 = math.log1p %8 : vector<16x128xf32>
    %cst_4 = arith.constant 0.000000e+00 : f32
    %10 = vector.broadcast %cst_4 : f32 to vector<16x128xf32>
    %11 = arith.minimumf %3, %10 : vector<16x128xf32>
    %12 = arith.subf %11, %9 : vector<16x128xf32>
    %cst_5 = arith.constant -1.000000e+02 : f32
    %13 = vector.broadcast %cst_5 : f32 to vector<16x128xf32>
    %14 = arith.maximumf %12, %13 : vector<16x128xf32>
    %cst_6 = arith.constant 0.000000e+00 : f32
    %15 = vector.broadcast %cst_6 : f32 to vector<16x128xf32>
    %16 = arith.maximumf %3, %15 : vector<16x128xf32>
    %cst_7 = arith.constant 0.000000e+00 : f32
    %17 = vector.broadcast %cst_7 : f32 to vector<16x128xf32>
    %18 = arith.subf %17, %16 : vector<16x128xf32>
    %19 = arith.subf %18, %9 : vector<16x128xf32>
    %cst_8 = arith.constant -1.000000e+02 : f32
    %20 = vector.broadcast %cst_8 : f32 to vector<16x128xf32>
    %21 = arith.maximumf %19, %20 : vector<16x128xf32>
    %cst_9 = arith.constant 0.000000e+00 : f32
    %22 = vector.broadcast %cst_9 : f32 to vector<16x128xf32>
    %23 = arith.cmpf oge, %3, %22 : vector<16x128xf32>
    %cst_10 = arith.constant 1.000000e+00 : f32
    %24 = vector.broadcast %cst_10 : f32 to vector<16x128xf32>
    %25 = arith.select %23, %24, %8 : vector<16x128xi1>, vector<16x128xf32>
    %cst_11 = arith.constant 1.000000e+00 : f32
    %26 = vector.broadcast %cst_11 : f32 to vector<16x128xf32>
    %27 = arith.addf %26, %8 : vector<16x128xf32>
    %28 = arith.divf %25, %27 : vector<16x128xf32>
    %29 = arith.mulf %4, %14 : vector<16x128xf32>
    %cst_12 = arith.constant 1.000000e+00 : f32
    %30 = vector.broadcast %cst_12 : f32 to vector<16x128xf32>
    %31 = arith.subf %30, %4 : vector<16x128xf32>
    %32 = arith.mulf %31, %21 : vector<16x128xf32>
    %33 = arith.addf %29, %32 : vector<16x128xf32>
    %cst_13 = arith.constant 0.000000e+00 : f32
    %34 = vector.broadcast %cst_13 : f32 to vector<16x128xf32>
    %35 = arith.subf %34, %33 : vector<16x128xf32>
    %c0_14 = arith.constant 0 : index
    %c0_15 = arith.constant 0 : index
    %36 = vector.load %arg4[%c0_14, %c0_15] : memref<8x128xf32, #tpu.memory_space<vmem>>, vector<1x128xf32>
    %37 = arith.mulf %28, %4 : vector<16x128xf32>
    %cst_16 = arith.constant dense<0.000000e+00> : vector<128xf32>
    %38 = vector.multi_reduction <add>, %37, %cst_16 [0] : vector<16x128xf32> to vector<128xf32>
    %39 = vector.shape_cast %38 : vector<128xf32> to vector<1x128xf32>
    %40 = arith.addf %36, %39 : vector<1x128xf32>
    %c0_17 = arith.constant 0 : index
    %c0_18 = arith.constant 0 : index
    %41 = vector.load %arg4[%c0_17, %c0_18] : memref<8x128xf32, #tpu.memory_space<vmem>>, vector<1x128xf32>
    tpu.vector_store %arg4[%c0_17, %c0_18], %40 {strides = array<i32>} : memref<8x128xf32, #tpu.memory_space<vmem>>, vector<1x128xf32>,
    %c1 = arith.constant 1 : index
    %c0_19 = arith.constant 0 : index
    %42 = vector.load %arg4[%c1, %c0_19] : memref<8x128xf32, #tpu.memory_space<vmem>>, vector<1x128xf32>
    %cst_20 = arith.constant dense<0.000000e+00> : vector<128xf32>
    %43 = vector.multi_reduction <add>, %28, %cst_20 [0] : vector<16x128xf32> to vector<128xf32>
    %44 = vector.shape_cast %43 : vector<128xf32> to vector<1x128xf32>
    %45 = arith.addf %42, %44 : vector<1x128xf32>
    %c1_21 = arith.constant 1 : index
    %c0_22 = arith.constant 0 : index
    %46 = vector.load %arg4[%c1_21, %c0_22] : memref<8x128xf32, #tpu.memory_space<vmem>>, vector<1x128xf32>
    tpu.vector_store %arg4[%c1_21, %c0_22], %45 {strides = array<i32>} : memref<8x128xf32, #tpu.memory_space<vmem>>, vector<1x128xf32>,
    %c2 = arith.constant 2 : index
    %c0_23 = arith.constant 0 : index
    %47 = vector.load %arg4[%c2, %c0_23] : memref<8x128xf32, #tpu.memory_space<vmem>>, vector<1x128xf32>
    %cst_24 = arith.constant dense<0.000000e+00> : vector<128xf32>
    %48 = vector.multi_reduction <add>, %4, %cst_24 [0] : vector<16x128xf32> to vector<128xf32>
    %49 = vector.shape_cast %48 : vector<128xf32> to vector<1x128xf32>
    %50 = arith.addf %47, %49 : vector<1x128xf32>
    %c2_25 = arith.constant 2 : index
    %c0_26 = arith.constant 0 : index
    %51 = vector.load %arg4[%c2_25, %c0_26] : memref<8x128xf32, #tpu.memory_space<vmem>>, vector<1x128xf32>
    tpu.vector_store %arg4[%c2_25, %c0_26], %50 {strides = array<i32>} : memref<8x128xf32, #tpu.memory_space<vmem>>, vector<1x128xf32>,
    %c3 = arith.constant 3 : index
    %c0_27 = arith.constant 0 : index
    %52 = vector.load %arg4[%c3, %c0_27] : memref<8x128xf32, #tpu.memory_space<vmem>>, vector<1x128xf32>
    %cst_28 = arith.constant dense<0.000000e+00> : vector<128xf32>
    %53 = vector.multi_reduction <add>, %35, %cst_28 [0] : vector<16x128xf32> to vector<128xf32>
    %54 = vector.shape_cast %53 : vector<128xf32> to vector<1x128xf32>
    %55 = arith.addf %52, %54 : vector<1x128xf32>
    %c3_29 = arith.constant 3 : index
    %c0_30 = arith.constant 0 : index
    %56 = vector.load %arg4[%c3_29, %c0_30] : memref<8x128xf32, #tpu.memory_space<vmem>>, vector<1x128xf32>
    tpu.vector_store %arg4[%c3_29, %c0_30], %55 {strides = array<i32>} : memref<8x128xf32, #tpu.memory_space<vmem>>, vector<1x128xf32>,
    return
  }
  func.func @transform_0(%arg0: i32, %arg1: i32) -> (i32, i32) {
    %c1_i32 = arith.constant 1 : i32
    %0 = arith.muli %arg0, %c1_i32 : i32
    %1 = arith.addi %0, %arg1 : i32
    %c0_i32 = arith.constant 0 : i32
    %c0_i32_0 = arith.constant 0 : i32
    return %1, %c0_i32 : i32, i32
  }
  func.func @transform_1(%arg0: i32, %arg1: i32) -> (i32, i32) {
    %c1_i32 = arith.constant 1 : i32
    %0 = arith.muli %arg0, %c1_i32 : i32
    %1 = arith.addi %0, %arg1 : i32
    %c0_i32 = arith.constant 0 : i32
    %c0_i32_0 = arith.constant 0 : i32
    return %1, %c0_i32 : i32, i32
  }
  func.func @transform_2(%arg0: i32, %arg1: i32) -> (i32, i32) {
    %c0_i32 = arith.constant 0 : i32
    %c0_i32_0 = arith.constant 0 : i32
    return %arg0, %c0_i32 : i32, i32
  }
}

</mosaic_0001>

<llo_original>
// kernel: dice_bce_loss.1
$region0: #{dice_bce_loss.1}
  #allocation0 [shape = 'u32[]', space=smem, size = 0x4, offset = 0x4, fixed_abs, tag = 'smem constant byte address 0x4 - core index']
  #allocation1 [shape = 'u32[144,128]{1,0:T(1,128)}', space=vmem, size = 0x12000, scoped, tag = 'internal scratch']
  %s0 = inlined_call_operand.vmem [shape: f32[16,128], index: 0, kind: input, shape index: {}]
  %s1 = inlined_call_operand.vmem [shape: f32[16,128], index: 1, kind: input, shape index: {}]
  %s2 = inlined_call_operand.vmem [shape: f32[8,128], index: 2, kind: output, shape index: {}]
  %s3 = sld [smem:[#allocation0]]
  $region22: #{dice_bce_loss.1} parent=0
    _
  %s5 = ssub.s32 1, %s3
  %s6 = scalar_select 0, %s5, %s3
  // Predicated region
  $region2: #{dice_bce_loss.1} parent=0 // pred_check
    _
  $region3: #{dice_bce_loss.1} parent=0 // pred_check_branch
    %8 = sbr.rel (0) target = $region5
  $region4: #{dice_bce_loss.1} parent=0 // pred_region
    %s9 = sadd.s32 0, 0
    %s10 = smul.u32 2, %s9
    %p11 = scmp.lt.s32.totalorder %s10, 1
    %s12 = scalar_select %p11, %s10, 1
    %s13 = smul.addr %s12, 8
    %s14 = scalar_lea.vmem %s0, %s13
    %s15 = sadd.s32 0, 0
    %s16 = smul.u32 2, %s15
  $region5: #{dice_bce_loss.1} parent=0 // pred_fallthru
    _
  // Predicated region
  $region6: #{dice_bce_loss.1} parent=0 // pred_check
    _
  $region7: #{dice_bce_loss.1} parent=0 // pred_check_branch
    %18 = sbr.rel (0) target = $region9
  $region8: #{dice_bce_loss.1} parent=0 // pred_region
    %s19 = sadd.s32 0, 0
    %s20 = smul.u32 2, %s19
    %p21 = scmp.lt.s32.totalorder %s20, 1
    %s22 = scalar_select %p21, %s20, 1
    %s23 = smul.addr %s22, 8
    %s24 = scalar_lea.vmem %s1, %s23
    %s25 = sadd.s32 0, 0
    %s26 = smul.u32 2, %s25
  $region9: #{dice_bce_loss.1} parent=0 // pred_fallthru
    _
  %s27 = sadd.s32 0, 0
  %s28 = smul.u32 2, %s27
  %p29 = scmp.lt.s32.totalorder %s28, 1
  %s30 = scalar_select %p29, %s28, 1
  %s31 = smul.addr %s30, 8
  %s32 = scalar_lea.vmem %s0, %s31
  %s33 = sadd.s32 0, 0
  %s34 = smul.u32 2, %s33
  %p35 = scmp.lt.s32.totalorder %s34, 1
  %s36 = scalar_select %p35, %s34, 1
  %s37 = smul.addr %s36, 8
  %s38 = scalar_lea.vmem %s1, %s37
  %s39 = sadd.s32 0, 0
  %s40 = smul.u32 2, %s39
  %p41 = scmp.lt.s32.totalorder %s40, 1
  %s42 = scalar_select %p41, %s40, 1
  %s43 = smul.addr %s42, 8
  %s44 = scalar_lea.vmem %s0, %s43
  %s45 = sadd.s32 0, 0
  %s46 = smul.u32 2, %s45
  %s47 = sadd.s32 0, 0
  %s48 = smul.u32 2, %s47
  %p49 = scmp.lt.s32.totalorder %s48, 1
  %s50 = scalar_select %p49, %s48, 1
  %s51 = smul.addr %s50, 8
  %s52 = scalar_lea.vmem %s1, %s51
  %s53 = sadd.s32 0, 0
  %s54 = smul.u32 2, %s53
  %p55 = scmp.eq.s32.totalorder 0, 0
  // Predicated region
  $region10: #{dice_bce_loss.1} parent=0 // pred_check
    %p56 = pneg %p55
  $region11: #{dice_bce_loss.1} parent=0 // pred_check_branch
    %58 = sbr.rel (%p56) target = $region13
  $region12: #{dice_bce_loss.1} parent=0 // pred_region
    %59 = vst [vmem:[%s2] sm:$0xff] 0.0
  $region13: #{dice_bce_loss.1} parent=0 // pred_fallthru
    _
  %v60 = vld [vmem:[%s44] sm:$0xff]
  %v61 = vld [vmem:[%s44 + $0x8] sm:$0xff]
  %v62 = vld [vmem:[%s52] sm:$0xff]
  %v63 = vld [vmem:[%s52 + $0x8] sm:$0xff]
  %v64 = vand.u32 2147483647, %v60
  %v65 = vand.u32 2147483647, %v61
  %v66 = vsub.f32 0.0, %v64
  %v67 = vsub.f32 0.0, %v65
  %v68 = vmul.f32 %v66, 1.442695
  %v69 = vpow.pop %v68
  %v70 = vmul.f32 %v67, 1.442695
  %v71 = vpow.pop %v70
  %v72 = vadd.f32 %v69, 1.0
  %v73 = vlog2.pop %v72
  %v74 = vmul.f32 %v73, 0.6931472
  %v75 = vmul.f32 -0.5, %v69
  %v76 = vadd.f32 %v75, 1.0
  %v77 = vmul.f32 %v76, %v69
  %v78 = vand.u32 2147483647, %v69
  %vm79 = vcmp.lt.f32.partialorder %v78, 0.0004427343
  %v80 = vsel %vm79, %v77, %v74
  %v81 = vadd.f32 %v71, 1.0
  %v82 = vlog2.pop %v81
  %v83 = vmul.f32 %v82, 0.6931472
  %v84 = vmul.f32 -0.5, %v71
  %v85 = vadd.f32 %v84, 1.0
  %v86 = vmul.f32 %v85, %v71
  %v87 = vand.u32 2147483647, %v71
  %vm88 = vcmp.lt.f32.partialorder %v87, 0.0004427343
  %v89 = vsel %vm88, %v86, %v83
  %v90 = vmin.f32 %v60, 0.0
  %v91 = vmin.f32 %v61, 0.0
  %v92 = vsub.f32 %v90, %v80
  %v93 = vsub.f32 %v91, %v89
  %v94 = vmax.f32 %v92, -100.0
  %v95 = vmax.f32 %v93, -100.0
  %v96 = vmax.f32 %v60, 0.0
  %v97 = vmax.f32 %v61, 0.0
  %v98 = vsub.f32 0.0, %v96
  %v99 = vsub.f32 0.0, %v97
  %v100 = vsub.f32 %v98, %v80
  %v101 = vsub.f32 %v99, %v89
  %v102 = vmax.f32 %v100, -100.0
  %v103 = vmax.f32 %v101, -100.0
  %vm104 = vcmp.ge.f32.partialorder %v60, 0.0
  %vm105 = vcmp.ge.f32.partialorder %v61, 0.0
  %v106 = vsel %vm104, 1.0, %v69
  %v107 = vsel %vm105, 1.0, %v71
  %v108 = vadd.f32 %v69, 1.0
  %v109 = vadd.f32 %v71, 1.0
  %v110 = vrcp.pop %v108
  %v111 = vmul.f32 %v106, %v110
  %v112 = vrcp.pop %v109
  %v113 = vmul.f32 %v107, %v112
  %v114 = vmul.f32 %v62, %v94
  %v115 = vmul.f32 %v63, %v95
  %v116 = vsub.f32 1.0, %v62
  %v117 = vsub.f32 1.0, %v63
  %v118 = vmul.f32 %v116, %v102
  %v119 = vmul.f32 %v117, %v103
  %v120 = vadd.f32 %v114, %v118
  %v121 = vadd.f32 %v115, %v119
  %v122 = vsub.f32 0.0, %v120
  %v123 = vsub.f32 0.0, %v121
  %v124 = vld [vmem:[%s2] sm:$0x1]
  %v125 = vmul.f32 %v111, %v62
  %v126 = vmul.f32 %v113, %v63
  %v127 = vadd.f32 %v125, %v126
  %v128 = vrot.slane %v127, 4
  %v129 = vadd.f32 %v127, %v128
  %v130 = vrot.slane %v129, 2
  %v131 = vadd.f32 %v129, %v130
  %v132 = vrot.slane %v131, 1
  %v133 = vadd.f32 %v131, %v132
  %v134 = vadd.f32 %v124, %v133
  %135 = vst [vmem:[%s2] sm:$0x1] %v134
  %v136 = vld [vmem:[%s2 + $0x1] sm:$0x1]
  %v137 = vadd.f32 %v111, %v113
  %v138 = vrot.slane %v137, 4
  %v139 = vadd.f32 %v137, %v138
  %v140 = vrot.slane %v139, 2
  %v141 = vadd.f32 %v139, %v140
  %v142 = vrot.slane %v141, 1
  %v143 = vadd.f32 %v141, %v142
  %v144 = vadd.f32 %v136, %v143
  %145 = vst [vmem:[%s2 + $0x1] sm:$0x1] %v144
  %v146 = vld [vmem:[%s2 + $0x2] sm:$0x1]
  %v147 = vadd.f32 %v62, %v63
  %v148 = vrot.slane %v147, 4
  %v149 = vadd.f32 %v147, %v148
  %v150 = vrot.slane %v149, 2
  %v151 = vadd.f32 %v149, %v150
  %v152 = vrot.slane %v151, 1
  %v153 = vadd.f32 %v151, %v152
  %v154 = vadd.f32 %v146, %v153
  %155 = vst [vmem:[%s2 + $0x2] sm:$0x1] %v154
  %v156 = vld [vmem:[%s2 + $0x3] sm:$0x1]
  %v157 = vadd.f32 %v122, %v123
  %v158 = vrot.slane %v157, 4
  %v159 = vadd.f32 %v157, %v158
  %v160 = vrot.slane %v159, 2
  %v161 = vadd.f32 %v159, %v160
  %v162 = vrot.slane %v161, 1
  %v163 = vadd.f32 %v161, %v162
  %v164 = vadd.f32 %v156, %v163
  %165 = vst [vmem:[%s2 + $0x3] sm:$0x1] %v164
  // Predicated region
  $region14: #{dice_bce_loss.1} parent=0 // pred_check
    _
  $region15: #{dice_bce_loss.1} parent=0 // pred_check_branch
    %167 = sbr.rel (0) target = $region17
  $region16: #{dice_bce_loss.1} parent=0 // pred_region
    _
  $region17: #{dice_bce_loss.1} parent=0 // pred_fallthru
    _
  // Predicated region
  $region18: #{dice_bce_loss.1} parent=0 // pred_check
    _
  $region19: #{dice_bce_loss.1} parent=0 // pred_check_branch
    %169 = sbr.rel (0) target = $region21
  $region20: #{dice_bce_loss.1} parent=0 // pred_region
    _
  $region21: #{dice_bce_loss.1} parent=0 // pred_fallthru
    _

</llo_original>
